<compile_context>
chip_gen: v7x
topology: tpu7x:2x2x1
jax: 0.10.0
libtpu: 0.0.40
codegen_flags: <defaults>
</compile_context>

<pallas_src>
import jax
import jax.numpy as jnp
from jax.experimental import pallas as pl
from jax.experimental.pallas import tpu as pltpu

_LANE = 128  # TPU lane width; last dim of every block


# ---------------------------------------------------------------------------
# Kernel: elementwise ReLU on a lane-dense f32 slab
# ---------------------------------------------------------------------------
def _relu_kernel(x_ref, o_ref):
    o_ref[...] = jnp.maximum(x_ref[...], 0.0)


def _relu_f32_stream(flat_f32, row_tile):
    """max(x, 0) over a flat f32 vector via one lane-dense Pallas call."""
    n = flat_f32.shape[0]
    rows = pl.cdiv(n, _LANE)
    padded_n = rows * _LANE
    if padded_n != n:                       # static: only for non-128-multiple sizes
        flat_f32 = jnp.pad(flat_f32, (0, padded_n - n))
    slab = flat_f32.reshape(rows, _LANE)

    tr = min(row_tile, rows)                # full slab if small, else row_tile x 128
    out = pl.pallas_call(
        _relu_kernel,
        out_shape=jax.ShapeDtypeStruct((rows, _LANE), jnp.float32),
        grid=(pl.cdiv(rows, tr),),
        in_specs=[pl.BlockSpec((tr, _LANE), lambda i: (i, 0))],
        out_specs=pl.BlockSpec((tr, _LANE), lambda i: (i, 0)),
        # Elementwise => grid steps independent; lets v7x use both TensorCores.
        compiler_params=pltpu.CompilerParams(
            dimension_semantics=("parallel",)),
        # Write the result in place of the temporary input slab.
        input_output_aliases={0: 0},
    )(slab)

    out_flat = out.reshape(-1)
    if padded_n != n:
        out_flat = out_flat[:n]
    return out_flat


# ---------------------------------------------------------------------------
# Wrapper: complex <-> interleaved-f32 plumbing (single fused XLA pass each way)
# ---------------------------------------------------------------------------
def complex_relu(x, *, row_tile=1024):
    """ReLU(Re(x)) + 1j * ReLU(Im(x)). Works for complex or real inputs, any shape."""
    orig_shape = x.shape

    if jnp.issubdtype(x.dtype, jnp.complexfloating):
        # TODO(synk): complex128 parts are processed in f32 (Mosaic has no f64
        # vector path); output is complex64, diverging from torch for c128.
        xr = jnp.real(x).astype(jnp.float32)
        xi = jnp.imag(x).astype(jnp.float32)
        # Interleaved (re, im) f32 "view" of the complex input (one fused pass;
        # lax.bitcast_convert_type does not support complex dtypes).
        flat = jnp.stack([xr, xi], axis=-1).reshape(-1)

        y_flat = _relu_f32_stream(flat, row_tile)

        pair = y_flat.reshape(orig_shape + (2,))
        return jax.lax.complex(pair[..., 0], pair[..., 1])
    else:
        # Real input: imag part is known-zero — don't stream zeros through HBM.
        flat = x.astype(jnp.float32).reshape(-1)
        y_flat = _relu_f32_stream(flat, row_tile)
        yr = y_flat.reshape(orig_shape)
        # Matches torch: real input still yields a complex result (imag = ReLU(0) = 0).
        return jax.lax.complex(yr, jnp.zeros_like(yr))


# jitted wrapper: interleave glue + the Pallas call compile into one XLA program.
complex_relu_jit = jax.jit(complex_relu)


# ---------------------------------------------------------------------------
# Pure-JAX reference (mirrors the PyTorch forward exactly)
# ---------------------------------------------------------------------------
def ref_complex_relu(x):
    return jax.lax.complex(
        jnp.maximum(jnp.real(x).astype(jnp.float32), 0.0),
        jnp.maximum(jnp.imag(x).astype(jnp.float32), 0.0),
    )


if __name__ == "__main__":
    key = jax.random.PRNGKey(0)
    kr, ki = jax.random.split(key)
    shape = (2, 4, 16, 16)                       # batch=2, channels=4, 16x16 spatial
    xr = jax.random.normal(kr, shape, jnp.float32)
    xi = jax.random.normal(ki, shape, jnp.float32)
    x = jax.lax.complex(xr, xi)                  # complex64 input

    y = complex_relu_jit(x)
    y = jax.block_until_ready(y)

    ref = ref_complex_relu(x)
    assert y.shape == x.shape and y.dtype == jnp.complex64, (y.shape, y.dtype)
    assert jnp.array_equal(y, ref), float(jnp.max(jnp.abs(y - ref)))

    print("KERNEL_OK")
</pallas_src>

<mosaic_0001>
module attributes {stable_mosaic.version = 11 : i64} {
  func.func @_relu_kernel(%arg0: i32, %arg1: memref<32x128xf32, #tpu.memory_space<vmem>>, %arg2: memref<32x128xf32, #tpu.memory_space<vmem>>) attributes {dimension_semantics = [#tpu.dimension_semantics<parallel>], iteration_bounds = array<i64: 1>, scalar_prefetch = 0 : i64, scratch_operands = 0 : i64, tpu.core_type = #tpu.core_type<tc>, window_params = [{transform_indices = @transform_0, window_bounds = array<i64: 32, 128>}, {transform_indices = @transform_1, window_bounds = array<i64: 32, 128>}]} {
    %c0 = arith.constant 0 : index
    %c0_0 = arith.constant 0 : index
    %0 = vector.load %arg1[%c0, %c0_0] : memref<32x128xf32, #tpu.memory_space<vmem>>, vector<32x128xf32>
    %cst = arith.constant 0.000000e+00 : f32
    %1 = vector.broadcast %cst : f32 to vector<32x128xf32>
    %2 = arith.maximumf %0, %1 : vector<32x128xf32>
    %c0_1 = arith.constant 0 : index
    %c0_2 = arith.constant 0 : index
    %3 = vector.load %arg2[%c0_1, %c0_2] : memref<32x128xf32, #tpu.memory_space<vmem>>, vector<32x128xf32>
    tpu.vector_store %arg2[%c0_1, %c0_2], %2 {strides = array<i32>} : memref<32x128xf32, #tpu.memory_space<vmem>>, vector<32x128xf32>,
    return
  }
  func.func @transform_0(%arg0: i32) -> (i32, i32) {
    %c0_i32 = arith.constant 0 : i32
    %c0_i32_0 = arith.constant 0 : i32
    return %arg0, %c0_i32 : i32, i32
  }
  func.func @transform_1(%arg0: i32) -> (i32, i32) {
    %c0_i32 = arith.constant 0 : i32
    %c0_i32_0 = arith.constant 0 : i32
    return %arg0, %c0_i32 : i32, i32
  }
}

</mosaic_0001>

<llo_original>
// kernel: custom-call.1
$region0: #{custom-call.1}
  %s0 = inlined_call_operand.hbm [shape: c64[2,4,16,16], index: 0, kind: input, shape index: {}]
  %s1 = inlined_call_operand.vmem [shape: f32[2,4,16,16], index: 1, kind: output, shape index: {}]
  %s2 = scalar_lea.hbm %s0, 2048
  $region1: #{custom-call.1} parent=0
    #allocation0 [shape = 's32[1]{0}', space=sflag, size = 0x4, scoped, tag = 'scoped memory for custom-call.1']
    %3 = vsyncpa [#allocation0], 0
    %s4 = sshll.u32 %s1, 4
    %s5 = int_to_ptr.vmem [resolvable:$true] %s4
    %7 = dma.hbm_to_vmem [thread:$0]  %s2, 2048, %s5, [#allocation0]
    %8 = dma.done [#allocation0], 2048
    %9 = vsyncpa [#allocation0], 1

// kernel: custom-call
$region0: #{custom-call}
  %s0 = inlined_call_operand.hbm [shape: c64[2,4,16,16], index: 0, kind: input, shape index: {}]
  %s1 = inlined_call_operand.vmem [shape: f32[2,4,16,16], index: 1, kind: output, shape index: {}]
  $region1: #{custom-call} parent=0
    #allocation0 [shape = 's32[1]{0}', space=sflag, size = 0x4, scoped, tag = 'scoped memory for custom-call']
    %2 = vsyncpa [#allocation0], 0
    %s3 = sshll.u32 %s1, 4
    %s4 = int_to_ptr.vmem [resolvable:$true] %s3
    %6 = dma.hbm_to_vmem [thread:$0]  %s0, 2048, %s4, [#allocation0]
    %7 = dma.done [#allocation0], 2048
    %8 = vsyncpa [#allocation0], 1

// kernel: complex_relu.1
$region0: #{complex_relu.1}
  #allocation0 [shape = 'u32[]', space=smem, size = 0x4, offset = 0x4, fixed_abs, tag = 'smem constant byte address 0x4 - core index']
  #allocation1 [shape = 'u32[144,128]{1,0:T(1,128)}', space=vmem, size = 0x12000, scoped, tag = 'internal scratch']
  %s0 = inlined_call_operand.vmem [shape: f32[32,128], index: 0, kind: input, shape index: {}, may-alias: {0,1}]
  %s1 = inlined_call_operand.vmem [shape: f32[32,128], index: 1, kind: output, shape index: {}, may-alias: {0,1}]
  %s2 = sld [smem:[#allocation0]]
  $region14: #{complex_relu.1} parent=0
    _
  %s4 = ssub.s32 1, %s2
  %s5 = scalar_select 0, %s4, %s2
  // Predicated region
  $region2: #{complex_relu.1} parent=0 // pred_check
    _
  $region3: #{complex_relu.1} parent=0 // pred_check_branch
    %7 = sbr.rel (0) target = $region5
  $region4: #{complex_relu.1} parent=0 // pred_region
    _
  $region5: #{complex_relu.1} parent=0 // pred_fallthru
    _
  %v8 = vld [vmem:[%s0] sm:$0xff]
  %v9 = vld [vmem:[%s0 + $0x8] sm:$0xff]
  %v10 = vld [vmem:[%s0 + $0x10] sm:$0xff]
  %v11 = vld [vmem:[%s0 + $0x18] sm:$0xff]
  %v12 = vmax.f32 %v8, 0.0
  %v13 = vmax.f32 %v9, 0.0
  %v14 = vmax.f32 %v10, 0.0
  %v15 = vmax.f32 %v11, 0.0
  %16 = vst [vmem:[%s1] sm:$0xff] %v12
  %17 = vst [vmem:[%s1 + $0x8] sm:$0xff] %v13
  %18 = vst [vmem:[%s1 + $0x10] sm:$0xff] %v14
  %19 = vst [vmem:[%s1 + $0x18] sm:$0xff] %v15
  // Predicated region
  $region6: #{complex_relu.1} parent=0 // pred_check
    _
  $region7: #{complex_relu.1} parent=0 // pred_check_branch
    %21 = sbr.rel (0) target = $region9
  $region8: #{complex_relu.1} parent=0 // pred_region
    _
  $region9: #{complex_relu.1} parent=0 // pred_fallthru
    _
  // Predicated region
  $region10: #{complex_relu.1} parent=0 // pred_check
    _
  $region11: #{complex_relu.1} parent=0 // pred_check_branch
    %23 = sbr.rel (0) target = $region13
  $region12: #{complex_relu.1} parent=0 // pred_region
    _
  $region13: #{complex_relu.1} parent=0 // pred_fallthru
    _

// kernel: custom-call.2
$region0: #{custom-call.2}
  %s0 = inlined_call_operand.vmem [shape: f32[2,4,16,16], index: 0, kind: input, shape index: {}]
  %s1 = inlined_call_operand.vmem [shape: f32[2,4,16,16], index: 1, kind: input, shape index: {}]
  %s2 = inlined_call_operand.hbm [shape: c64[2,4,16,16], index: 2, kind: output, shape index: {}]
  %s3 = scalar_lea.hbm %s2, 2048
  $region1: #{custom-call.2} parent=0
    #allocation0 [shape = 's32[1]{0}', space=sflag, size = 0x4, scoped, tag = 'scoped memory for custom-call.2']
    %4 = vsyncpa [#allocation0], 0
    %s5 = sshll.u32 %s0, 4
    %s6 = int_to_ptr.vmem [resolvable:$true] %s5
    %8 = dma.vmem_to_hbm [thread:$0]  %s6, 2048, %s2, [#allocation0]
    %9 = dma.done [#allocation0], 2048
    %10 = vsyncpa [#allocation0], 1
  $region2: #{custom-call.2} parent=0
    #allocation1 [shape = 's32[1]{0}', space=sflag, size = 0x4, scoped, tag = 'scoped memory for custom-call.2']
    %11 = vsyncpa [#allocation1], 0
    %s12 = sshll.u32 %s1, 4
    %s13 = int_to_ptr.vmem [resolvable:$true] %s12
    %15 = dma.vmem_to_hbm [thread:$0]  %s13, 2048, %s3, [#allocation1]
    %16 = dma.done [#allocation1], 2048
    %17 = vsyncpa [#allocation1], 1

</llo_original>
